<compile_context>
chip_gen: v5e
topology: v5e:2x2
jax: 0.10.0
libtpu: 0.0.40
codegen_flags: <defaults>
</compile_context>

<pallas_src>
import jax
import jax.numpy as jnp
from jax.experimental import pallas as pl
from jax.experimental.pallas import tpu as pltpu

EPS = 1e-6  # matches AffineFree_LayerNorm.eps in the PyTorch module


def _affine_free_ln_kernel(x_ref, o_ref):
    # x_ref / o_ref: (bb, C, tile_hw) blocks in VMEM.
    # Channel axis (-2) lives on sublanes; spatial axis (-1) is lane-dense.
    xf = x_ref[...].astype(jnp.float32)
    mean = jnp.mean(xf, axis=-2, keepdims=True)
    d = xf - mean
    var = jnp.mean(d * d, axis=-2, keepdims=True)      # unbiased=False (biased)
    inv = jax.lax.rsqrt(var + EPS)
    # Scale in the input dtype: bf16 write-path multiply on v6e/v7x, and no
    # extra full-block f32 temporary on the store path.
    # TODO(synk): verify via pl.lower_as_mlir that `xf` is not materialized as a
    # second full-block VMEM temp across the two variance passes on huge tiles.
    o_ref[...] = x_ref[...] * inv.astype(o_ref.dtype)


def _round_up(x, m):
    return ((x + m - 1) // m) * m


def _chip_profile():
    """Returns (tensorcores_per_chip, target padded block bytes, recognized)."""
    kind = ""
    try:
        kind = jax.devices()[0].device_kind.lower()
    except Exception:
        pass
    if "v7" in kind:
        return 2, 5 << 20, True    # 3.2 TB/s HBM: bigger blocks; 64 MiB physical VMEM
    if "v6" in kind:
        return 1, 2 << 20, True    # single TC
    if "v5p" in kind or "v4" in kind:
        return 2, 2 << 20, True    # megacore (2 TCs)
    if "v5" in kind:
        return 1, 2 << 20, True    # v5e: 16 MiB scoped default -> raise explicitly
    return 1, 1 << 20, False       # unknown: small blocks, keep default scoped VMEM


def _block_plan(b, c, hw, dtype):
    """Pick (batch_block, hw_tile, vmem_limit_bytes) for the (B, C, HW) view."""
    itemsize = jnp.dtype(dtype).itemsize
    sublane_mult = 8 * max(1, 4 // itemsize)          # f32: 8, bf16: 16, int8: 32
    c_pad = _round_up(c, sublane_mult)
    c_pad_f32 = _round_up(c, 8)
    cores, target, recognized = _chip_profile()

    def in_block_bytes(bb, thw):
        return bb * c_pad * _round_up(thw, 128) * itemsize

    full_sample = in_block_bytes(1, hw)
    if full_sample <= target:
        # Small feature map: fold several batch elements into one block so the
        # fixed per-grid-step cost is amortized and the DMA is one big transfer.
        bb = max(1, min(b, target // max(1, full_sample)))
        if cores >= 2 and b >= 2:
            bb = min(bb, -(-b // 2))                  # >= 2 even-ish steps for 2 TCs
        tile_hw = hw
    else:
        # Large feature map: lane-dense 128-multiple spatial tiles, one sample
        # per block (keeps the per-row DMA fully contiguous).
        bb = 1
        tile_hw = max(128, (target // (c_pad * itemsize)) // 128 * 128)
        tile_hw = min(tile_hw, hw)                    # tile < hw in this branch

    # VMEM budget: in + out blocks are each double-buffered (x4 padded block),
    # plus in-kernel f32 temporaries, plus compiler-scratch margin.
    blk_in = in_block_bytes(bb, tile_hw)
    blk_f32 = bb * c_pad_f32 * _round_up(tile_hw, 128) * 4
    vmem_needed = 4 * blk_in + 3 * blk_f32 + (4 << 20)
    vmem_limit = max(32 << 20, vmem_needed) if recognized else None
    return bb, tile_hw, vmem_limit


def affine_free_layernorm_nchw(x_nchw):
    """AffineFree_LayerNorm over the channel axis of an NCHW tensor.

    Equivalent to the SSUFSR usage: to_3d(x) -> var over the last (channel)
    axis -> x / sqrt(var + 1e-6) -> to_4d, implemented directly on the native
    NCHW layout via a zero-copy reshape to (B, C, H*W).  Output dtype matches
    the input dtype; statistics are computed in f32.
    """
    b, c, h, w = x_nchw.shape
    hw = h * w
    x3 = x_nchw.reshape(b, c, hw)                     # zero-copy view of NCHW
    bb, tile_hw, vmem_limit = _block_plan(b, c, hw, x3.dtype)
    grid = (pl.cdiv(b, bb), pl.cdiv(hw, tile_hw))

    out = pl.pallas_call(
        _affine_free_ln_kernel,
        out_shape=jax.ShapeDtypeStruct((b, c, hw), x3.dtype),
        grid_spec=pltpu.PrefetchScalarGridSpec(
            num_scalar_prefetch=0,
            grid=grid,
            in_specs=[pl.BlockSpec((bb, c, tile_hw), lambda i, j: (i, 0, j))],
            out_specs=pl.BlockSpec((bb, c, tile_hw), lambda i, j: (i, 0, j)),
        ),
        compiler_params=pltpu.CompilerParams(
            dimension_semantics=("parallel", "parallel"),
            vmem_limit_bytes=vmem_limit,
        ),
    )(x3)
    return out.reshape(b, c, h, w)


def _reference(x_nchw):
    # Pure-JAX reference of the PyTorch forward (biased variance over channels).
    xf = x_nchw.astype(jnp.float32)
    var = jnp.var(xf, axis=1, keepdims=True)          # unbiased=False
    y = xf / jnp.sqrt(var + EPS)
    return y.astype(x_nchw.dtype)


if __name__ == "__main__":
    key = jax.random.PRNGKey(0)
    # Small NCHW input consistent with the module's usage: B=2, C=4, H=W=16.
    x = jax.random.normal(key, (2, 4, 16, 16), dtype=jnp.float32)

    y = jax.block_until_ready(affine_free_layernorm_nchw(x))

    y_ref = _reference(x)
    assert y.shape == x.shape
    assert jnp.allclose(y, y_ref, atol=1e-5, rtol=1e-5), float(
        jnp.max(jnp.abs(y - y_ref))
    )

    print("KERNEL_OK")
</pallas_src>

<mosaic_0001>
module attributes {stable_mosaic.version = 11 : i64} {
  func.func @_affine_free_ln_kernel(%arg0: i32, %arg1: i32, %arg2: memref<2x4x256xf32, #tpu.memory_space<vmem>>, %arg3: memref<2x4x256xf32, #tpu.memory_space<vmem>>) attributes {dimension_semantics = [#tpu.dimension_semantics<parallel>, #tpu.dimension_semantics<parallel>], iteration_bounds = array<i64: 1, 1>, scalar_prefetch = 0 : i64, scratch_operands = 0 : i64, tpu.core_type = #tpu.core_type<tc>, window_params = [{transform_indices = @transform_0, window_bounds = array<i64: 2, 4, 256>}, {transform_indices = @transform_1, window_bounds = array<i64: 2, 4, 256>}]} {
    %c0 = arith.constant 0 : index
    %c0_0 = arith.constant 0 : index
    %c0_1 = arith.constant 0 : index
    %0 = vector.load %arg2[%c0, %c0_0, %c0_1] : memref<2x4x256xf32, #tpu.memory_space<vmem>>, vector<2x4x256xf32>
    %cst = arith.constant dense<0.000000e+00> : vector<2x256xf32>
    %1 = vector.multi_reduction <add>, %0, %cst [1] : vector<2x4x256xf32> to vector<2x256xf32>
    %2 = vector.shape_cast %1 : vector<2x256xf32> to vector<2x1x256xf32>
    %cst_2 = arith.constant 4.000000e+00 : f32
    %3 = vector.broadcast %cst_2 : f32 to vector<2x1x256xf32>
    %4 = arith.divf %2, %3 : vector<2x1x256xf32>
    %5 = vector.broadcast %4 : vector<2x1x256xf32> to vector<2x4x256xf32>
    %6 = arith.subf %0, %5 : vector<2x4x256xf32>
    %7 = arith.mulf %6, %6 : vector<2x4x256xf32>
    %cst_3 = arith.constant dense<0.000000e+00> : vector<2x256xf32>
    %8 = vector.multi_reduction <add>, %7, %cst_3 [1] : vector<2x4x256xf32> to vector<2x256xf32>
    %9 = vector.shape_cast %8 : vector<2x256xf32> to vector<2x1x256xf32>
    %cst_4 = arith.constant 4.000000e+00 : f32
    %10 = vector.broadcast %cst_4 : f32 to vector<2x1x256xf32>
    %11 = arith.divf %9, %10 : vector<2x1x256xf32>
    %cst_5 = arith.constant 9.99999997E-7 : f32
    %12 = vector.broadcast %cst_5 : f32 to vector<2x1x256xf32>
    %13 = arith.addf %11, %12 : vector<2x1x256xf32>
    %14 = math.rsqrt %13 : vector<2x1x256xf32>
    %c0_6 = arith.constant 0 : index
    %c0_7 = arith.constant 0 : index
    %c0_8 = arith.constant 0 : index
    %15 = vector.load %arg2[%c0_6, %c0_7, %c0_8] : memref<2x4x256xf32, #tpu.memory_space<vmem>>, vector<2x4x256xf32>
    %16 = vector.broadcast %14 : vector<2x1x256xf32> to vector<2x4x256xf32>
    %17 = arith.mulf %15, %16 : vector<2x4x256xf32>
    %c0_9 = arith.constant 0 : index
    %c0_10 = arith.constant 0 : index
    %c0_11 = arith.constant 0 : index
    %18 = vector.load %arg3[%c0_9, %c0_10, %c0_11] : memref<2x4x256xf32, #tpu.memory_space<vmem>>, vector<2x4x256xf32>
    tpu.vector_store %arg3[%c0_9, %c0_10, %c0_11], %17 {strides = array<i32>} : memref<2x4x256xf32, #tpu.memory_space<vmem>>, vector<2x4x256xf32>,
    return
  }
  func.func @transform_0(%arg0: i32, %arg1: i32) -> (i32, i32, i32) {
    %c0_i32 = arith.constant 0 : i32
    %c0_i32_0 = arith.constant 0 : i32
    return %arg0, %c0_i32, %arg1 : i32, i32, i32
  }
  func.func @transform_1(%arg0: i32, %arg1: i32) -> (i32, i32, i32) {
    %c0_i32 = arith.constant 0 : i32
    %c0_i32_0 = arith.constant 0 : i32
    return %arg0, %c0_i32, %arg1 : i32, i32, i32
  }
}

</mosaic_0001>

<llo_original>
// kernel: tpu_custom_call.1
$region0: #{tpu_custom_call.1}
  #allocation0 [shape = 'u32[]', space=smem, size = 0x4, offset = 0x4, fixed_abs, tag = 'smem constant byte address 0x4 - core index']
  #allocation1 [shape = 'u32[72,128]{1,0:T(1,128)}', space=vmem, size = 0x9000, scoped, tag = 'internal scratch']
  %s0 = inlined_call_operand.hbm [shape: f32[2,4,256], index: 0, kind: input, shape index: {}]
  %s1 = inlined_call_operand.hbm [shape: f32[2,4,256], index: 1, kind: output, shape index: {}]
  %s2 = sld [smem:[#allocation0]]
  $region18: #{tpu_custom_call.1} parent=0
    _
  %s4 = ssub.s32 1, %s2
  %s5 = scalar_select 0, %s4, %s2
  $region1: #{tpu_custom_call.1} parent=0
    #allocation2 [shape = 'u8[8192]{0}', space=vmem, size = 0x2000, scoped, tag = 'input window, operand 0, single buffered']
    #allocation3 [shape = 's32[1]{0}', space=sflag, size = 0x4, scoped, tag = 'scoped memory for tpu_custom_call.1']
    #allocation4 [shape = 's32[1]{0}', space=sflag, size = 0x4, scoped, tag = 'scoped memory for tpu_custom_call.1']
    #allocation5 [shape = 'u8[8192]{0}', space=vmem, size = 0x2000, scoped, tag = 'output window, operand 0, single buffered']
    %6 = vsyncpa [#allocation3], 0
    %7 = vsyncpa [#allocation4], 0
    // Predicated region
    $region2: #{tpu_custom_call.1} parent=1 // pred_check
      _
    $region3: #{tpu_custom_call.1} parent=1 // pred_check_branch
      %9 = sbr.rel (0) target = $region5
    $region4: #{tpu_custom_call.1} parent=1 // pred_region
      %11 = vsyncadd [#allocation3], 0
      %s12 = sshll.u32 %s0, 4
      %s13 = int_to_ptr.hbm [resolvable:$true] %s12
      %s14 = sshll.u32 [#allocation2], 4
      %s15 = int_to_ptr.vmem [resolvable:$true] %s14
      %20 = dma.hbm_to_vmem [thread:$0]  %s13, 256, %s15, [#allocation3], 128, 128, 8
    $region5: #{tpu_custom_call.1} parent=1 // pred_fallthru
      _
    // Predicated region
    $region6: #{tpu_custom_call.1} parent=1 // pred_check
      _
    $region7: #{tpu_custom_call.1} parent=1 // pred_check_branch
      %22 = sbr.rel (0) target = $region9
    $region8: #{tpu_custom_call.1} parent=1 // pred_region
      %24 = dma.done [#allocation3], 256
    $region9: #{tpu_custom_call.1} parent=1 // pred_fallthru
      _
    %v25 = vld [vmem:[#allocation2] sm:$0xff]
    %v26 = vld [vmem:[#allocation2 + $0x8] sm:$0xff]
    %29 = vst [vmem:[#allocation1] ss:$2 sm:$0xff] %v25
    %v30 = vld.sshfl [vmem:[#allocation1] sm:$0xff pattern:$0x75316420]
    %v31 = vld.sshfl [vmem:[#allocation1 + $0x8] sm:$0xff pattern:$0x75316420]
    %s32 = scalar_lea.vmem [#allocation1], 16
    %33 = vst [vmem:[%s32] ss:$2 sm:$0xff] %v26
    %v34 = vld.sshfl [vmem:[#allocation1 + $0x10] sm:$0xff pattern:$0x75316420]
    %v35 = vld.sshfl [vmem:[#allocation1 + $0x18] sm:$0xff pattern:$0x75316420]
    %vm40 = vcmask 1043456
    %v41 = vsel %vm40, %v30, 0.0
    %v42 = vrot.slane %v41, 4
    %v43 = vadd.f32 %v41, %v42
    %v44 = vrot.slane %v43, 2
    %v45 = vadd.f32 %v43, %v44
    %v46 = vrot.slane %v45, 1
    %v47 = vadd.f32 %v45, %v46
    %v48 = vsel %vm40, %v31, 0.0
    %v49 = vrot.slane %v48, 4
    %v50 = vadd.f32 %v48, %v49
    %v51 = vrot.slane %v50, 2
    %v52 = vadd.f32 %v50, %v51
    %v53 = vrot.slane %v52, 1
    %v54 = vadd.f32 %v52, %v53
    %v55 = vsel %vm40, %v34, 0.0
    %v56 = vrot.slane %v55, 4
    %v57 = vadd.f32 %v55, %v56
    %v58 = vrot.slane %v57, 2
    %v59 = vadd.f32 %v57, %v58
    %v60 = vrot.slane %v59, 1
    %v61 = vadd.f32 %v59, %v60
    %v62 = vsel %vm40, %v35, 0.0
    %v63 = vrot.slane %v62, 4
    %v64 = vadd.f32 %v62, %v63
    %v65 = vrot.slane %v64, 2
    %v66 = vadd.f32 %v64, %v65
    %v67 = vrot.slane %v66, 1
    %v68 = vadd.f32 %v66, %v67
    %v69 = vrcp.pop 4.0
    %v70 = vmul.f32 4.0, %v69
    %v71 = vsub.f32 1.0, %v70
    %v72 = vmul.f32 %v69, %v71
    %v73 = vadd.f32 %v69, %v72
    %vm74 = vweird.f32 %v69
    %v75 = vsel %vm74, %v69, %v73
    %v76 = vmul.f32 %v47, %v75
    %v77 = vmul.f32 %v54, %v75
    %v78 = vmul.f32 %v61, %v75
    %v79 = vmul.f32 %v68, %v75
    %v84 = vrot.slane %v77, 4
    %v85 = vrot.slane %v79, 4
    %v86 = vsel %vm40, %v76, %v84
    %v87 = vsel %vm40, %v78, %v85
    %v90 = vsub.f32 %v25, %v86
    %v91 = vsub.f32 %v26, %v87
    %v92 = vmul.f32 %v90, %v90
    %v93 = vmul.f32 %v91, %v91
    %96 = vst [vmem:[#allocation1] ss:$2 sm:$0xff] %v92
    %v97 = vld.sshfl [vmem:[#allocation1] sm:$0xff pattern:$0x75316420]
    %v98 = vld.sshfl [vmem:[#allocation1 + $0x8] sm:$0xff pattern:$0x75316420]
    %s99 = scalar_lea.vmem [#allocation1], 16
    %100 = vst [vmem:[%s99] ss:$2 sm:$0xff] %v93
    %v101 = vld.sshfl [vmem:[#allocation1 + $0x10] sm:$0xff pattern:$0x75316420]
    %v102 = vld.sshfl [vmem:[#allocation1 + $0x18] sm:$0xff pattern:$0x75316420]
    %v107 = vsel %vm40, %v97, 0.0
    %v108 = vrot.slane %v107, 4
    %v109 = vadd.f32 %v107, %v108
    %v110 = vrot.slane %v109, 2
    %v111 = vadd.f32 %v109, %v110
    %v112 = vrot.slane %v111, 1
    %v113 = vadd.f32 %v111, %v112
    %v114 = vsel %vm40, %v98, 0.0
    %v115 = vrot.slane %v114, 4
    %v116 = vadd.f32 %v114, %v115
    %v117 = vrot.slane %v116, 2
    %v118 = vadd.f32 %v116, %v117
    %v119 = vrot.slane %v118, 1
    %v120 = vadd.f32 %v118, %v119
    %v121 = vsel %vm40, %v101, 0.0
    %v122 = vrot.slane %v121, 4
    %v123 = vadd.f32 %v121, %v122
    %v124 = vrot.slane %v123, 2
    %v125 = vadd.f32 %v123, %v124
    %v126 = vrot.slane %v125, 1
    %v127 = vadd.f32 %v125, %v126
    %v128 = vsel %vm40, %v102, 0.0
    %v129 = vrot.slane %v128, 4
    %v130 = vadd.f32 %v128, %v129
    %v131 = vrot.slane %v130, 2
    %v132 = vadd.f32 %v130, %v131
    %v133 = vrot.slane %v132, 1
    %v134 = vadd.f32 %v132, %v133
    %v135 = vmul.f32 %v113, %v75
    %v136 = vmul.f32 %v120, %v75
    %v137 = vmul.f32 %v127, %v75
    %v138 = vmul.f32 %v134, %v75
    %v139 = vadd.f32 %v135, 1e-06
    %v140 = vadd.f32 %v136, 1e-06
    %v141 = vadd.f32 %v137, 1e-06
    %v142 = vadd.f32 %v138, 1e-06
    %v143 = vrsqrt.pop %v139
    %v144 = vmul.f32 %v143, %v139
    %v145 = vmul.f32 %v144, %v143
    %v146 = vmul.f32 0.5, %v145
    %v147 = vsub.f32 1.5, %v146
    %v148 = vmul.f32 %v143, %v147
    %vm149 = vweird.f32 %v139
    %vm150 = vweird.f32 %v143
    %vm151 = vmor %vm149, %vm150
    %v152 = vsel %vm151, %v143, %v148
    %v153 = vrsqrt.pop %v140
    %v154 = vmul.f32 %v153, %v140
    %v155 = vmul.f32 %v154, %v153
    %v156 = vmul.f32 0.5, %v155
    %v157 = vsub.f32 1.5, %v156
    %v158 = vmul.f32 %v153, %v157
    %vm159 = vweird.f32 %v140
    %vm160 = vweird.f32 %v153
    %vm161 = vmor %vm159, %vm160
    %v162 = vsel %vm161, %v153, %v158
    %v163 = vrsqrt.pop %v141
    %v164 = vmul.f32 %v163, %v141
    %v165 = vmul.f32 %v164, %v163
    %v166 = vmul.f32 0.5, %v165
    %v167 = vsub.f32 1.5, %v166
    %v168 = vmul.f32 %v163, %v167
    %vm169 = vweird.f32 %v141
    %vm170 = vweird.f32 %v163
    %vm171 = vmor %vm169, %vm170
    %v172 = vsel %vm171, %v163, %v168
    %v173 = vrsqrt.pop %v142
    %v174 = vmul.f32 %v173, %v142
    %v175 = vmul.f32 %v174, %v173
    %v176 = vmul.f32 0.5, %v175
    %v177 = vsub.f32 1.5, %v176
    %v178 = vmul.f32 %v173, %v177
    %vm179 = vweird.f32 %v142
    %vm180 = vweird.f32 %v173
    %vm181 = vmor %vm179, %vm180
    %v182 = vsel %vm181, %v173, %v178
    %v187 = vrot.slane %v162, 4
    %v188 = vrot.slane %v182, 4
    %v189 = vsel %vm40, %v152, %v187
    %v190 = vsel %vm40, %v172, %v188
    %v193 = vmul.f32 %v25, %v189
    %v194 = vmul.f32 %v26, %v190
    %195 = vst [vmem:[#allocation5] sm:$0xff] %v193
    %196 = vst [vmem:[#allocation5 + $0x8] sm:$0xff] %v194
    // Predicated region
    $region10: #{tpu_custom_call.1} parent=1 // pred_check
      _
    $region11: #{tpu_custom_call.1} parent=1 // pred_check_branch
      %198 = sbr.rel (0) target = $region13
    $region12: #{tpu_custom_call.1} parent=1 // pred_region
      %200 = vsyncadd [#allocation4], 0
      %s201 = sshll.u32 [#allocation5], 4
      %s202 = int_to_ptr.vmem [resolvable:$true] %s201
      %s203 = sshll.u32 %s1, 4
      %s204 = int_to_ptr.hbm [resolvable:$true] %s203
      %209 = dma.vmem_to_hbm [thread:$0]  %s202, 256, %s204, [#allocation4], 128, 128, 8
    $region13: #{tpu_custom_call.1} parent=1 // pred_fallthru
      _
    // Predicated region
    $region14: #{tpu_custom_call.1} parent=1 // pred_check
      _
    $region15: #{tpu_custom_call.1} parent=1 // pred_check_branch
      %211 = sbr.rel (0) target = $region17
    $region16: #{tpu_custom_call.1} parent=1 // pred_region
      %213 = dma.done [#allocation4], 256
    $region17: #{tpu_custom_call.1} parent=1 // pred_fallthru
      _
    %214 = vsyncpa [#allocation3], 1
    %215 = vsyncpa [#allocation4], 1

</llo_original>
